<compile_context>
chip_gen: v7x
topology: tpu7x:2x2x1
jax: 0.10.0
libtpu: 0.0.40
codegen_flags: <defaults>
</compile_context>

<pallas_src>
import functools
import math

import jax
import jax.numpy as jnp
from jax.experimental import pallas as pl
from jax.experimental.pallas import tpu as pltpu


# --------------------------------------------------------------------------- #
# Helpers
# --------------------------------------------------------------------------- #
def _const_block_spec(shape):
    """BlockSpec for a block that is resident across the whole grid.

    Single-buffered (pl.Buffered(1)) when supported, so Pallas does not allocate
    a useless second VMEM buffer for blocks whose index map never changes.
    """
    index_map = lambda *_: (0,) * len(shape)
    try:
        return pl.BlockSpec(shape, index_map, pipeline_mode=pl.Buffered(1))
    except (TypeError, AttributeError):   # older jax without pipeline_mode
        return pl.BlockSpec(shape, index_map)


def _pick_tile(n, max_tile):
    """Largest tile <= max_tile (multiple of 8) dividing n, else n itself."""
    if n <= max_tile:
        return n
    for t in range(max_tile, 7, -8):
        if n % t == 0:
            return t
    # TODO(synk): pad S up to a multiple of 8/128 (with key masking) instead of
    #             falling back to one huge block for awkward sequence lengths.
    return n


def _vmem_limit_bytes(working_set_bytes):
    """Working set * 1.5 + headroom, capped at 80% of the chip's VMEM."""
    try:
        cap = getattr(pltpu.get_tpu_info(), "vmem_capacity_bytes", None)
    except Exception:
        cap = None
    if not cap:
        cap = 64 << 20          # conservative (v7x per-core VMEM)
    want = int(working_set_bytes * 1.5) + (2 << 20)
    return int(max(min(want, int(cap * 0.8)), 8 << 20))


# --------------------------------------------------------------------------- #
# Stage 1: fused Q/K/V projections, emitted in per-head (B, H, S, d_k) layout
# --------------------------------------------------------------------------- #
def _qkv_proj_kernel(q_ref, k_ref, v_ref, wq_ref, wk_ref, wv_ref,
                     qf_ref, kf_ref, vf_ref, *, head, d_k, q_scale):
    """Block shapes:
      q/k/v_ref   (1, tr, D)   input rows (original dtype)
      w*_ref      (D, D)       bf16 weights, resident (single-buffered)
      *_f_ref     (1, H, tr, d_k)  bf16 per-head projected outputs
    """
    cd = wq_ref.dtype

    def project(x_ref, w_ref, o_ref, scale):
        x = x_ref[0].astype(cd)                                       # (tr, D)
        y = jnp.dot(x, w_ref[...], preferred_element_type=jnp.float32)
        if scale != 1.0:
            y = y * scale                                             # fold 1/sqrt(d_k)
        y = y.astype(o_ref.dtype)
        for h in range(head):                                         # plain slice stores
            o_ref[0, h] = y[:, h * d_k:(h + 1) * d_k]

    project(q_ref, wq_ref, qf_ref, q_scale)
    project(k_ref, wk_ref, kf_ref, 1.0)
    project(v_ref, wv_ref, vf_ref, 1.0)


# --------------------------------------------------------------------------- #
# Stage 2: key-tiled online-softmax attention + fused output projection
# --------------------------------------------------------------------------- #
def _attn_kernel(*refs, head, d_k, has_mask):
    if has_mask:
        (qf_ref, kf_ref, vf_ref, mask_ref, wo_ref, o_ref,
         m_sc, l_sc, acc_sc, ctx_sc) = refs
    else:
        (qf_ref, kf_ref, vf_ref, wo_ref, o_ref,
         m_sc, l_sc, acc_sc, ctx_sc) = refs
        mask_ref = None

    j = pl.program_id(2)

    @pl.when(j == 0)
    def _init():
        m_sc[...] = jnp.full_like(m_sc, -jnp.inf)
        l_sc[...] = jnp.zeros_like(l_sc)
        acc_sc[...] = jnp.zeros_like(acc_sc)

    q = qf_ref[0]                    # (H, tq, d_k) bf16, already scaled by 1/sqrt(d_k)
    k = kf_ref[0]                    # (H, tk, d_k) bf16
    v = vf_ref[0]                    # (H, tk, d_k) bf16

    # scores for all heads in one batched MXU call, f32 accumulation
    s = jnp.einsum('hqd,hkd->hqk', q, k,
                   preferred_element_type=jnp.float32)                # (H, tq, tk)

    if has_mask:
        msk0 = mask_ref[0] == 0                                       # (tq, tk) bool
        s = jnp.where(msk0[None, :, :], jnp.float32(-1e9), s)

    # online softmax update (f32)
    m_prev = m_sc[...]                                                # (H, tq, 1)
    m_new = jnp.maximum(m_prev, jnp.max(s, axis=-1, keepdims=True))
    alpha = jnp.exp(m_prev - m_new)
    p = jnp.exp(s - m_new)                                            # (H, tq, tk)
    l_sc[...] = alpha * l_sc[...] + jnp.sum(p, axis=-1, keepdims=True)
    pv = jnp.einsum('hqk,hkd->hqd', p.astype(v.dtype), v,
                    preferred_element_type=jnp.float32)               # (H, tq, d_k)
    acc_sc[...] = alpha * acc_sc[...] + pv
    m_sc[...] = m_new

    # Inference-mode dropout => identity on the attention probabilities.
    @pl.when(j == pl.num_programs(2) - 1)
    def _finalize():
        # NOTE: approximate EUP reciprocal (l >= 1 always) — softmax has ~1e-3
        # relative error vs an exact divide.
        ctx = acc_sc[...] * pl.reciprocal(l_sc[...], approx=True)     # (H, tq, d_k) f32
        for h in range(head):                                         # head "concat" =
            ctx_sc[:, h * d_k:(h + 1) * d_k] = ctx[h].astype(ctx_sc.dtype)  # slice stores
        out = jnp.dot(ctx_sc[...], wo_ref[...],
                      preferred_element_type=jnp.float32)             # (tq, D)
        o_ref[0] = out.astype(o_ref.dtype)


# --------------------------------------------------------------------------- #
# Wrapper
# --------------------------------------------------------------------------- #
def multi_head_attention(q, k, v, mask, wq, wk, wv, wo, *, head,
                         compute_dtype=jnp.bfloat16,
                         q_tile=256, k_tile=512, r_tile=512):
    """q, k, v: (B, S, D).  mask: broadcastable to (B, S, S) (or (B,1,S,S)) or None.

    Weights are (in_features, out_features); y = x @ W, bias-free — same linear
    map as nn.Linear(bias=False).
    """
    B, S, D = q.shape
    assert D % head == 0, "d_model is not divisible by h"
    d_k = D // head
    out_dtype = q.dtype
    cd = jnp.dtype(compute_dtype)
    cd_b = cd.itemsize
    in_b = jnp.dtype(q.dtype).itemsize
    out_b = jnp.dtype(out_dtype).itemsize

    # bf16 weights: halves weight DMA + VMEM residency, MXU-native operands.
    wq_c, wk_c, wv_c, wo_c = (jnp.asarray(w).astype(cd) for w in (wq, wk, wv, wo))

    # ---------------- Stage 1: Q/K/V projections (once per token) -------------
    tr = _pick_tile(S, r_tile)
    proj_ws = (3 * tr * D * in_b * 2          # q/k/v input tiles (double-buffered)
               + 3 * D * D * cd_b             # resident weights (single-buffered)
               + 3 * tr * D * cd_b * 2        # projected output tiles
               + 3 * tr * D * 4)              # f32 matmul results
    proj_shape = jax.ShapeDtypeStruct((B, head, S, d_k), cd)

    qf, kf, vf = pl.pallas_call(
        functools.partial(_qkv_proj_kernel, head=head, d_k=d_k,
                          q_scale=1.0 / math.sqrt(d_k)),
        out_shape=(proj_shape, proj_shape, proj_shape),
        grid_spec=pltpu.PrefetchScalarGridSpec(
            num_scalar_prefetch=0,
            grid=(B, S // tr),
            in_specs=[
                pl.BlockSpec((1, tr, D), lambda b, i: (b, i, 0)),   # q rows
                pl.BlockSpec((1, tr, D), lambda b, i: (b, i, 0)),   # k rows
                pl.BlockSpec((1, tr, D), lambda b, i: (b, i, 0)),   # v rows
                _const_block_spec((D, D)),                          # W_q
                _const_block_spec((D, D)),                          # W_k
                _const_block_spec((D, D)),                          # W_v
            ],
            out_specs=[
                pl.BlockSpec((1, head, tr, d_k), lambda b, i: (b, 0, i, 0)),
                pl.BlockSpec((1, head, tr, d_k), lambda b, i: (b, 0, i, 0)),
                pl.BlockSpec((1, head, tr, d_k), lambda b, i: (b, 0, i, 0)),
            ],
        ),
        compiler_params=pltpu.CompilerParams(
            dimension_semantics=("parallel", "parallel"),
            vmem_limit_bytes=_vmem_limit_bytes(proj_ws),
        ),
    )(q, k, v, wq_c, wk_c, wv_c)

    # ---------------- Stage 2: key-tiled attention + output projection --------
    tq = _pick_tile(S, q_tile)
    tk = _pick_tile(S, k_tile)
    grid = (B, S // tq, S // tk)

    has_mask = mask is not None
    inputs = [qf, kf, vf]
    in_specs = [
        pl.BlockSpec((1, head, tq, d_k), lambda b, i, j: (b, 0, i, 0)),  # Q tile
        pl.BlockSpec((1, head, tk, d_k), lambda b, i, j: (b, 0, j, 0)),  # K tile
        pl.BlockSpec((1, head, tk, d_k), lambda b, i, j: (b, 0, j, 0)),  # V tile
    ]
    if has_mask:
        m_arr = jnp.asarray(mask)
        if m_arr.ndim == 4:           # e.g. (B,1,S,S) — head-broadcast masks only
            m_arr = m_arr[:, 0]
        mask_i8 = (jnp.broadcast_to(m_arr, (B, S, S)) != 0).astype(jnp.int8)
        inputs.append(mask_i8)
        in_specs.append(pl.BlockSpec((1, tq, tk), lambda b, i, j: (b, i, j)))
    inputs.append(wo_c)
    in_specs.append(_const_block_spec((D, D)))                            # W_o

    attn_ws = (tq * D * cd_b * 2                       # Q tile
               + 2 * tk * D * cd_b * 2                 # K/V tiles
               + (tq * tk * 1 * 2 if has_mask else 0)  # int8 mask tile
               + D * D * cd_b                          # resident Wo
               + tq * D * out_b * 2                    # output tile
               + (2 * head * tq + head * tq * d_k) * 4 + tq * D * cd_b   # scratch
               + 2 * head * tq * tk * 4)               # scores + probs (f32)

    out = pl.pallas_call(
        functools.partial(_attn_kernel, head=head, d_k=d_k, has_mask=has_mask),
        out_shape=jax.ShapeDtypeStruct((B, S, D), out_dtype),
        grid_spec=pltpu.PrefetchScalarGridSpec(
            num_scalar_prefetch=0,
            grid=grid,
            in_specs=in_specs,
            out_specs=pl.BlockSpec((1, tq, D), lambda b, i, j: (b, i, 0)),
            scratch_shapes=[
                pltpu.VMEM((head, tq, 1), jnp.float32),    # running max
                pltpu.VMEM((head, tq, 1), jnp.float32),    # running denom
                pltpu.VMEM((head, tq, d_k), jnp.float32),  # running numerator
                pltpu.VMEM((tq, D), cd),                   # concat(head) context
            ],
        ),
        compiler_params=pltpu.CompilerParams(
            dimension_semantics=("parallel", "parallel", "arbitrary"),
            vmem_limit_bytes=_vmem_limit_bytes(attn_ws),
        ),
    )(*inputs)
    return out


# --------------------------------------------------------------------------- #
# Pure-JAX reference (transcription of the PyTorch forward, inference dropout)
# --------------------------------------------------------------------------- #
def reference_mha(q, k, v, mask, wq, wk, wv, wo, *, head):
    B, S, D = q.shape
    d_k = D // head
    Q = (q @ wq).reshape(B, S, head, d_k).transpose(0, 2, 1, 3)
    K = (k @ wk).reshape(B, S, head, d_k).transpose(0, 2, 1, 3)
    V = (v @ wv).reshape(B, S, head, d_k).transpose(0, 2, 1, 3)
    scores = (Q @ jnp.swapaxes(K, -1, -2)) / math.sqrt(d_k)
    if mask is not None:
        m = jnp.broadcast_to(jnp.asarray(mask, jnp.float32), (B, S, S))
        scores = jnp.where(m[:, None, :, :] == 0, -1e9, scores)
    attn = jax.nn.softmax(scores, axis=-1)
    ctx = (attn @ V).transpose(0, 2, 1, 3).reshape(B, S, D)
    return ctx @ wo


if __name__ == "__main__":
    B, S, D, head = 2, 8, 32, 4

    key = jax.random.PRNGKey(0)
    kq, kk, kv, kwq, kwk, kwv, kwo = jax.random.split(key, 7)

    q = jax.random.normal(kq, (B, S, D), dtype=jnp.float32)
    k = jax.random.normal(kk, (B, S, D), dtype=jnp.float32)
    v = jax.random.normal(kv, (B, S, D), dtype=jnp.float32)

    bound = 1.0 / math.sqrt(D)
    wq = jax.random.uniform(kwq, (D, D), jnp.float32, -bound, bound)
    wk = jax.random.uniform(kwk, (D, D), jnp.float32, -bound, bound)
    wv = jax.random.uniform(kwv, (D, D), jnp.float32, -bound, bound)
    wo = jax.random.uniform(kwo, (D, D), jnp.float32, -bound, bound)

    # Causal mask (mask == 0 positions filled with -1e9, as in the module).
    mask = jnp.broadcast_to(jnp.tril(jnp.ones((S, S), jnp.float32)), (B, S, S))

    out = jax.block_until_ready(
        multi_head_attention(q, k, v, mask, wq, wk, wv, wo, head=head))
    ref = reference_mha(q, k, v, mask, wq, wk, wv, wo, head=head)
    assert out.shape == (B, S, D)
    # Tolerance loosened vs pure-f32: bf16 MXU operands + approximate EUP
    # reciprocal in the softmax (per the perf review).
    assert jnp.allclose(out, ref, atol=3e-2, rtol=3e-2), "mismatch vs reference (masked)"

    # mask=None path (no mask input DMA'd at all).
    out_nm = jax.block_until_ready(
        multi_head_attention(q, k, v, None, wq, wk, wv, wo, head=head))
    ref_nm = reference_mha(q, k, v, None, wq, wk, wv, wo, head=head)
    assert jnp.allclose(out_nm, ref_nm, atol=3e-2, rtol=3e-2), "mismatch vs reference (no mask)"

    print("KERNEL_OK")
</pallas_src>

<mosaic_0001>
module attributes {stable_mosaic.version = 11 : i64} {
  func.func @_qkv_proj_kernel(%arg0: i32, %arg1: i32, %arg2: memref<1x8x32xf32, #tpu.memory_space<vmem>>, %arg3: memref<1x8x32xf32, #tpu.memory_space<vmem>>, %arg4: memref<1x8x32xf32, #tpu.memory_space<vmem>>, %arg5: memref<32x32xbf16, #tpu.memory_space<vmem>>, %arg6: memref<32x32xbf16, #tpu.memory_space<vmem>>, %arg7: memref<32x32xbf16, #tpu.memory_space<vmem>>, %arg8: memref<1x4x8x8xbf16, #tpu.memory_space<vmem>>, %arg9: memref<1x4x8x8xbf16, #tpu.memory_space<vmem>>, %arg10: memref<1x4x8x8xbf16, #tpu.memory_space<vmem>>) attributes {dimension_semantics = [#tpu.dimension_semantics<parallel>, #tpu.dimension_semantics<parallel>], iteration_bounds = array<i64: 2, 1>, scalar_prefetch = 0 : i64, scratch_operands = 0 : i64, tpu.core_type = #tpu.core_type<tc>, window_params = [{transform_indices = @transform_0, window_bounds = array<i64: 1, 8, 32>}, {transform_indices = @transform_1, window_bounds = array<i64: 1, 8, 32>}, {transform_indices = @transform_2, window_bounds = array<i64: 1, 8, 32>}, {pipeline_mode = #tpu.pipeline_mode<synchronous>, transform_indices = @transform_3, window_bounds = array<i64: 32, 32>}, {pipeline_mode = #tpu.pipeline_mode<synchronous>, transform_indices = @transform_4, window_bounds = array<i64: 32, 32>}, {pipeline_mode = #tpu.pipeline_mode<synchronous>, transform_indices = @transform_5, window_bounds = array<i64: 32, 32>}, {transform_indices = @transform_6, window_bounds = array<i64: 1, 4, 8, 8>}, {transform_indices = @transform_7, window_bounds = array<i64: 1, 4, 8, 8>}, {transform_indices = @transform_8, window_bounds = array<i64: 1, 4, 8, 8>}]} {
    %c0 = arith.constant 0 : index
    %c0_0 = arith.constant 0 : index
    %c0_1 = arith.constant 0 : index
    %0 = vector.load %arg2[%c0, %c0_0, %c0_1] : memref<1x8x32xf32, #tpu.memory_space<vmem>>, vector<1x8x32xf32>
    %1 = vector.shape_cast %0 : vector<1x8x32xf32> to vector<8x32xf32>
    %2 = arith.truncf %1 : vector<8x32xf32> to vector<8x32xbf16>
    %c0_2 = arith.constant 0 : index
    %c0_3 = arith.constant 0 : index
    %3 = vector.load %arg5[%c0_2, %c0_3] : memref<32x32xbf16, #tpu.memory_space<vmem>>, vector<32x32xbf16>
    %cst = arith.constant dense<0.000000e+00> : vector<8x32xf32>
    %4 = tpu.matmul %2, %3, %cst {dimension_numbers = #tpu.dot_dimension_numbers<[1], [0], [0], [1], [0, 0, 1, 1], [], []>} : vector<8x32xbf16>, vector<32x32xbf16>, vector<8x32xf32> -> vector<8x32xf32>
    %cst_4 = arith.constant 0.353553385 : f32
    %5 = vector.broadcast %cst_4 : f32 to vector<8x32xf32>
    %6 = arith.mulf %4, %5 : vector<8x32xf32>
    %7 = arith.truncf %6 : vector<8x32xf32> to vector<8x32xbf16>
    %8 = vector.extract_strided_slice %7 {offsets = [0, 0], sizes = [8, 8], strides = [1, 1]} : vector<8x32xbf16> to vector<8x8xbf16>
    %c0_5 = arith.constant 0 : index
    %c0_6 = arith.constant 0 : index
    %c0_7 = arith.constant 0 : index
    %c0_8 = arith.constant 0 : index
    %9 = vector.load %arg8[%c0_5, %c0_6, %c0_7, %c0_8] : memref<1x4x8x8xbf16, #tpu.memory_space<vmem>>, vector<1x1x8x8xbf16>
    %10 = vector.shape_cast %9 : vector<1x1x8x8xbf16> to vector<8x8xbf16>
    %11 = vector.shape_cast %8 : vector<8x8xbf16> to vector<1x1x8x8xbf16>
    tpu.vector_store %arg8[%c0_5, %c0_6, %c0_7, %c0_8], %11 {strides = array<i32>} : memref<1x4x8x8xbf16, #tpu.memory_space<vmem>>, vector<1x1x8x8xbf16>,
    %12 = vector.extract_strided_slice %7 {offsets = [0, 8], sizes = [8, 8], strides = [1, 1]} : vector<8x32xbf16> to vector<8x8xbf16>
    %c0_9 = arith.constant 0 : index
    %c1 = arith.constant 1 : index
    %c0_10 = arith.constant 0 : index
    %c0_11 = arith.constant 0 : index
    %13 = vector.load %arg8[%c0_9, %c1, %c0_10, %c0_11] : memref<1x4x8x8xbf16, #tpu.memory_space<vmem>>, vector<1x1x8x8xbf16>
    %14 = vector.shape_cast %13 : vector<1x1x8x8xbf16> to vector<8x8xbf16>
    %15 = vector.shape_cast %12 : vector<8x8xbf16> to vector<1x1x8x8xbf16>
    tpu.vector_store %arg8[%c0_9, %c1, %c0_10, %c0_11], %15 {strides = array<i32>} : memref<1x4x8x8xbf16, #tpu.memory_space<vmem>>, vector<1x1x8x8xbf16>,
    %16 = vector.extract_strided_slice %7 {offsets = [0, 16], sizes = [8, 8], strides = [1, 1]} : vector<8x32xbf16> to vector<8x8xbf16>
    %c0_12 = arith.constant 0 : index
    %c2 = arith.constant 2 : index
    %c0_13 = arith.constant 0 : index
    %c0_14 = arith.constant 0 : index
    %17 = vector.load %arg8[%c0_12, %c2, %c0_13, %c0_14] : memref<1x4x8x8xbf16, #tpu.memory_space<vmem>>, vector<1x1x8x8xbf16>
    %18 = vector.shape_cast %17 : vector<1x1x8x8xbf16> to vector<8x8xbf16>
    %19 = vector.shape_cast %16 : vector<8x8xbf16> to vector<1x1x8x8xbf16>
    tpu.vector_store %arg8[%c0_12, %c2, %c0_13, %c0_14], %19 {strides = array<i32>} : memref<1x4x8x8xbf16, #tpu.memory_space<vmem>>, vector<1x1x8x8xbf16>,
    %20 = vector.extract_strided_slice %7 {offsets = [0, 24], sizes = [8, 8], strides = [1, 1]} : vector<8x32xbf16> to vector<8x8xbf16>
    %c0_15 = arith.constant 0 : index
    %c3 = arith.constant 3 : index
    %c0_16 = arith.constant 0 : index
    %c0_17 = arith.constant 0 : index
    %21 = vector.load %arg8[%c0_15, %c3, %c0_16, %c0_17] : memref<1x4x8x8xbf16, #tpu.memory_space<vmem>>, vector<1x1x8x8xbf16>
    %22 = vector.shape_cast %21 : vector<1x1x8x8xbf16> to vector<8x8xbf16>
    %23 = vector.shape_cast %20 : vector<8x8xbf16> to vector<1x1x8x8xbf16>
    tpu.vector_store %arg8[%c0_15, %c3, %c0_16, %c0_17], %23 {strides = array<i32>} : memref<1x4x8x8xbf16, #tpu.memory_space<vmem>>, vector<1x1x8x8xbf16>,
    %c0_18 = arith.constant 0 : index
    %c0_19 = arith.constant 0 : index
    %c0_20 = arith.constant 0 : index
    %24 = vector.load %arg3[%c0_18, %c0_19, %c0_20] : memref<1x8x32xf32, #tpu.memory_space<vmem>>, vector<1x8x32xf32>
    %25 = vector.shape_cast %24 : vector<1x8x32xf32> to vector<8x32xf32>
    %26 = arith.truncf %25 : vector<8x32xf32> to vector<8x32xbf16>
    %c0_21 = arith.constant 0 : index
    %c0_22 = arith.constant 0 : index
    %27 = vector.load %arg6[%c0_21, %c0_22] : memref<32x32xbf16, #tpu.memory_space<vmem>>, vector<32x32xbf16>
    %cst_23 = arith.constant dense<0.000000e+00> : vector<8x32xf32>
    %28 = tpu.matmul %26, %27, %cst_23 {dimension_numbers = #tpu.dot_dimension_numbers<[1], [0], [0], [1], [0, 0, 1, 1], [], []>} : vector<8x32xbf16>, vector<32x32xbf16>, vector<8x32xf32> -> vector<8x32xf32>
    %29 = arith.truncf %28 : vector<8x32xf32> to vector<8x32xbf16>
    %30 = vector.extract_strided_slice %29 {offsets = [0, 0], sizes = [8, 8], strides = [1, 1]} : vector<8x32xbf16> to vector<8x8xbf16>
    %c0_24 = arith.constant 0 : index
    %c0_25 = arith.constant 0 : index
    %c0_26 = arith.constant 0 : index
    %c0_27 = arith.constant 0 : index
    %31 = vector.load %arg9[%c0_24, %c0_25, %c0_26, %c0_27] : memref<1x4x8x8xbf16, #tpu.memory_space<vmem>>, vector<1x1x8x8xbf16>
    %32 = vector.shape_cast %31 : vector<1x1x8x8xbf16> to vector<8x8xbf16>
    %33 = vector.shape_cast %30 : vector<8x8xbf16> to vector<1x1x8x8xbf16>
    tpu.vector_store %arg9[%c0_24, %c0_25, %c0_26, %c0_27], %33 {strides = array<i32>} : memref<1x4x8x8xbf16, #tpu.memory_space<vmem>>, vector<1x1x8x8xbf16>,
    %34 = vector.extract_strided_slice %29 {offsets = [0, 8], sizes = [8, 8], strides = [1, 1]} : vector<8x32xbf16> to vector<8x8xbf16>
    %c0_28 = arith.constant 0 : index
    %c1_29 = arith.constant 1 : index
    %c0_30 = arith.constant 0 : index
    %c0_31 = arith.constant 0 : index
    %35 = vector.load %arg9[%c0_28, %c1_29, %c0_30, %c0_31] : memref<1x4x8x8xbf16, #tpu.memory_space<vmem>>, vector<1x1x8x8xbf16>
    %36 = vector.shape_cast %35 : vector<1x1x8x8xbf16> to vector<8x8xbf16>
    %37 = vector.shape_cast %34 : vector<8x8xbf16> to vector<1x1x8x8xbf16>
    tpu.vector_store %arg9[%c0_28, %c1_29, %c0_30, %c0_31], %37 {strides = array<i32>} : memref<1x4x8x8xbf16, #tpu.memory_space<vmem>>, vector<1x1x8x8xbf16>,
    %38 = vector.extract_strided_slice %29 {offsets = [0, 16], sizes = [8, 8], strides = [1, 1]} : vector<8x32xbf16> to vector<8x8xbf16>
    %c0_32 = arith.constant 0 : index
    %c2_33 = arith.constant 2 : index
    %c0_34 = arith.constant 0 : index
    %c0_35 = arith.constant 0 : index
    %39 = vector.load %arg9[%c0_32, %c2_33, %c0_34, %c0_35] : memref<1x4x8x8xbf16, #tpu.memory_space<vmem>>, vector<1x1x8x8xbf16>
    %40 = vector.shape_cast %39 : vector<1x1x8x8xbf16> to vector<8x8xbf16>
    %41 = vector.shape_cast %38 : vector<8x8xbf16> to vector<1x1x8x8xbf16>
    tpu.vector_store %arg9[%c0_32, %c2_33, %c0_34, %c0_35], %41 {strides = array<i32>} : memref<1x4x8x8xbf16, #tpu.memory_space<vmem>>, vector<1x1x8x8xbf16>,
    %42 = vector.extract_strided_slice %29 {offsets = [0, 24], sizes = [8, 8], strides = [1, 1]} : vector<8x32xbf16> to vector<8x8xbf16>
    %c0_36 = arith.constant 0 : index
    %c3_37 = arith.constant 3 : index
    %c0_38 = arith.constant 0 : index
    %c0_39 = arith.constant 0 : index
    %43 = vector.load %arg9[%c0_36, %c3_37, %c0_38, %c0_39] : memref<1x4x8x8xbf16, #tpu.memory_space<vmem>>, vector<1x1x8x8xbf16>
    %44 = vector.shape_cast %43 : vector<1x1x8x8xbf16> to vector<8x8xbf16>
    %45 = vector.shape_cast %42 : vector<8x8xbf16> to vector<1x1x8x8xbf16>
    tpu.vector_store %arg9[%c0_36, %c3_37, %c0_38, %c0_39], %45 {strides = array<i32>} : memref<1x4x8x8xbf16, #tpu.memory_space<vmem>>, vector<1x1x8x8xbf16>,
    %c0_40 = arith.constant 0 : index
    %c0_41 = arith.constant 0 : index
    %c0_42 = arith.constant 0 : index
    %46 = vector.load %arg4[%c0_40, %c0_41, %c0_42] : memref<1x8x32xf32, #tpu.memory_space<vmem>>, vector<1x8x32xf32>
    %47 = vector.shape_cast %46 : vector<1x8x32xf32> to vector<8x32xf32>
    %48 = arith.truncf %47 : vector<8x32xf32> to vector<8x32xbf16>
    %c0_43 = arith.constant 0 : index
    %c0_44 = arith.constant 0 : index
    %49 = vector.load %arg7[%c0_43, %c0_44] : memref<32x32xbf16, #tpu.memory_space<vmem>>, vector<32x32xbf16>
    %cst_45 = arith.constant dense<0.000000e+00> : vector<8x32xf32>
    %50 = tpu.matmul %48, %49, %cst_45 {dimension_numbers = #tpu.dot_dimension_numbers<[1], [0], [0], [1], [0, 0, 1, 1], [], []>} : vector<8x32xbf16>, vector<32x32xbf16>, vector<8x32xf32> -> vector<8x32xf32>
    %51 = arith.truncf %50 : vector<8x32xf32> to vector<8x32xbf16>
    %52 = vector.extract_strided_slice %51 {offsets = [0, 0], sizes = [8, 8], strides = [1, 1]} : vector<8x32xbf16> to vector<8x8xbf16>
    %c0_46 = arith.constant 0 : index
    %c0_47 = arith.constant 0 : index
    %c0_48 = arith.constant 0 : index
    %c0_49 = arith.constant 0 : index
    %53 = vector.load %arg10[%c0_46, %c0_47, %c0_48, %c0_49] : memref<1x4x8x8xbf16, #tpu.memory_space<vmem>>, vector<1x1x8x8xbf16>
    %54 = vector.shape_cast %53 : vector<1x1x8x8xbf16> to vector<8x8xbf16>
    %55 = vector.shape_cast %52 : vector<8x8xbf16> to vector<1x1x8x8xbf16>
    tpu.vector_store %arg10[%c0_46, %c0_47, %c0_48, %c0_49], %55 {strides = array<i32>} : memref<1x4x8x8xbf16, #tpu.memory_space<vmem>>, vector<1x1x8x8xbf16>,
    %56 = vector.extract_strided_slice %51 {offsets = [0, 8], sizes = [8, 8], strides = [1, 1]} : vector<8x32xbf16> to vector<8x8xbf16>
    %c0_50 = arith.constant 0 : index
    %c1_51 = arith.constant 1 : index
    %c0_52 = arith.constant 0 : index
    %c0_53 = arith.constant 0 : index
    %57 = vector.load %arg10[%c0_50, %c1_51, %c0_52, %c0_53] : memref<1x4x8x8xbf16, #tpu.memory_space<vmem>>, vector<1x1x8x8xbf16>
    %58 = vector.shape_cast %57 : vector<1x1x8x8xbf16> to vector<8x8xbf16>
    %59 = vector.shape_cast %56 : vector<8x8xbf16> to vector<1x1x8x8xbf16>
    tpu.vector_store %arg10[%c0_50, %c1_51, %c0_52, %c0_53], %59 {strides = array<i32>} : memref<1x4x8x8xbf16, #tpu.memory_space<vmem>>, vector<1x1x8x8xbf16>,
    %60 = vector.extract_strided_slice %51 {offsets = [0, 16], sizes = [8, 8], strides = [1, 1]} : vector<8x32xbf16> to vector<8x8xbf16>
    %c0_54 = arith.constant 0 : index
    %c2_55 = arith.constant 2 : index
    %c0_56 = arith.constant 0 : index
    %c0_57 = arith.constant 0 : index
    %61 = vector.load %arg10[%c0_54, %c2_55, %c0_56, %c0_57] : memref<1x4x8x8xbf16, #tpu.memory_space<vmem>>, vector<1x1x8x8xbf16>
    %62 = vector.shape_cast %61 : vector<1x1x8x8xbf16> to vector<8x8xbf16>
    %63 = vector.shape_cast %60 : vector<8x8xbf16> to vector<1x1x8x8xbf16>
    tpu.vector_store %arg10[%c0_54, %c2_55, %c0_56, %c0_57], %63 {strides = array<i32>} : memref<1x4x8x8xbf16, #tpu.memory_space<vmem>>, vector<1x1x8x8xbf16>,
    %64 = vector.extract_strided_slice %51 {offsets = [0, 24], sizes = [8, 8], strides = [1, 1]} : vector<8x32xbf16> to vector<8x8xbf16>
    %c0_58 = arith.constant 0 : index
    %c3_59 = arith.constant 3 : index
    %c0_60 = arith.constant 0 : index
    %c0_61 = arith.constant 0 : index
    %65 = vector.load %arg10[%c0_58, %c3_59, %c0_60, %c0_61] : memref<1x4x8x8xbf16, #tpu.memory_space<vmem>>, vector<1x1x8x8xbf16>
    %66 = vector.shape_cast %65 : vector<1x1x8x8xbf16> to vector<8x8xbf16>
    %67 = vector.shape_cast %64 : vector<8x8xbf16> to vector<1x1x8x8xbf16>
    tpu.vector_store %arg10[%c0_58, %c3_59, %c0_60, %c0_61], %67 {strides = array<i32>} : memref<1x4x8x8xbf16, #tpu.memory_space<vmem>>, vector<1x1x8x8xbf16>,
    return
  }
  func.func @transform_0(%arg0: i32, %arg1: i32) -> (i32, i32, i32) {
    %c0_i32 = arith.constant 0 : i32
    %c0_i32_0 = arith.constant 0 : i32
    return %arg0, %arg1, %c0_i32 : i32, i32, i32
  }
  func.func @transform_1(%arg0: i32, %arg1: i32) -> (i32, i32, i32) {
    %c0_i32 = arith.constant 0 : i32
    %c0_i32_0 = arith.constant 0 : i32
    return %arg0, %arg1, %c0_i32 : i32, i32, i32
  }
  func.func @transform_2(%arg0: i32, %arg1: i32) -> (i32, i32, i32) {
    %c0_i32 = arith.constant 0 : i32
    %c0_i32_0 = arith.constant 0 : i32
    return %arg0, %arg1, %c0_i32 : i32, i32, i32
  }
  func.func @transform_3(%arg0: i32, %arg1: i32) -> (i32, i32) {
    %c0_i32 = arith.constant 0 : i32
    %c0_i32_0 = arith.constant 0 : i32
    %c0_i32_1 = arith.constant 0 : i32
    return %c0_i32, %c0_i32_0 : i32, i32
  }
  func.func @transform_4(%arg0: i32, %arg1: i32) -> (i32, i32) {
    %c0_i32 = arith.constant 0 : i32
    %c0_i32_0 = arith.constant 0 : i32
    %c0_i32_1 = arith.constant 0 : i32
    return %c0_i32, %c0_i32_0 : i32, i32
  }
  func.func @transform_5(%arg0: i32, %arg1: i32) -> (i32, i32) {
    %c0_i32 = arith.constant 0 : i32
    %c0_i32_0 = arith.constant 0 : i32
    %c0_i32_1 = arith.constant 0 : i32
    return %c0_i32, %c0_i32_0 : i32, i32
  }
  func.func @transform_6(%arg0: i32, %arg1: i32) -> (i32, i32, i32, i32) {
    %c0_i32 = arith.constant 0 : i32
    %c0_i32_0 = arith.constant 0 : i32
    %c0_i32_1 = arith.constant 0 : i32
    return %arg0, %c0_i32, %arg1, %c0_i32_0 : i32, i32, i32, i32
  }
  func.func @transform_7(%arg0: i32, %arg1: i32) -> (i32, i32, i32, i32) {
    %c0_i32 = arith.constant 0 : i32
    %c0_i32_0 = arith.constant 0 : i32
    %c0_i32_1 = arith.constant 0 : i32
    return %arg0, %c0_i32, %arg1, %c0_i32_0 : i32, i32, i32, i32
  }
  func.func @transform_8(%arg0: i32, %arg1: i32) -> (i32, i32, i32, i32) {
    %c0_i32 = arith.constant 0 : i32
    %c0_i32_0 = arith.constant 0 : i32
    %c0_i32_1 = arith.constant 0 : i32
    return %arg0, %c0_i32, %arg1, %c0_i32_0 : i32, i32, i32, i32
  }
}

</mosaic_0001>

<llo_original>
// kernel: tpu_custom_call.1
$region0: #{tpu_custom_call.1}
  #allocation0 [shape = 'u32[]', space=smem, size = 0x4, offset = 0x4, fixed_abs, tag = 'smem constant byte address 0x4 - core index']
  #allocation1 [shape = 'u32[144,128]{1,0:T(1,128)}', space=vmem, size = 0x12000, scoped, tag = 'internal scratch']
  %s0 = inlined_call_operand.hbm [shape: f32[2,8,32], index: 0, kind: input, shape index: {}]
  %s1 = inlined_call_operand.hbm [shape: f32[2,8,32], index: 1, kind: input, shape index: {}]
  %s2 = inlined_call_operand.hbm [shape: f32[2,8,32], index: 2, kind: input, shape index: {}]
  %s3 = inlined_call_operand.hbm [shape: bf16[32,32], index: 3, kind: input, shape index: {}]
  %s4 = inlined_call_operand.hbm [shape: bf16[32,32], index: 4, kind: input, shape index: {}]
  %s5 = inlined_call_operand.vmem [shape: bf16[32,32], index: 5, kind: input, shape index: {}]
  %s6 = inlined_call_operand.hbm [shape: bf16[2,4,8,8], index: 6, kind: output, shape index: {0}]
  %s7 = inlined_call_operand.hbm [shape: bf16[2,4,8,8], index: 7, kind: output, shape index: {1}]
  %s8 = inlined_call_operand.hbm [shape: bf16[2,4,8,8], index: 8, kind: output, shape index: {2}]
  %9 = xla_tuple %s6, %s7, %s8
  %s10 = sld [smem:[#allocation0]]
  $region93: #{tpu_custom_call.1} parent=0
    _
  %s12 = ssub.s32 1, %s10
  %s13 = scalar_select 0, %s12, %s10
  $region1: #{tpu_custom_call.1} parent=0
    #allocation2 [shape = 'u8[8192]{0}', space=vmem, size = 0x2000, scoped, tag = 'input window, operand 0']
    #allocation3 [shape = 's32[2]{0}', space=sflag, size = 0x8, scoped, tag = 'scoped memory for tpu_custom_call.1']
    #allocation4 [shape = 's32[2]{0}', space=sflag, size = 0x8, scoped, tag = 'scoped memory for tpu_custom_call.1']
    #allocation5 [shape = 'u8[8192]{0}', space=vmem, size = 0x2000, scoped, tag = 'input window, operand 1']
    #allocation6 [shape = 's32[2]{0}', space=sflag, size = 0x8, scoped, tag = 'scoped memory for tpu_custom_call.1']
    #allocation7 [shape = 'u8[8192]{0}', space=vmem, size = 0x2000, scoped, tag = 'input window, operand 2']
    #allocation8 [shape = 'u8[8192]{0}', space=vmem, size = 0x2000, scoped, tag = 'input window, operand 3, single buffered']
    #allocation9 [shape = 's32[1]{0}', space=sflag, size = 0x4, scoped, tag = 'scoped memory for tpu_custom_call.1']
    #allocation10 [shape = 'u8[8192]{0}', space=vmem, size = 0x2000, scoped, tag = 'input window, operand 4, single buffered']
    #allocation11 [shape = 'u8[16384]{0}', space=vmem, size = 0x4000, scoped, tag = 'output window, operand 0']
    #allocation12 [shape = 'u8[16384]{0}', space=vmem, size = 0x4000, scoped, tag = 'output window, operand 1']
    #allocation13 [shape = 's32[2]{0}', space=sflag, size = 0x8, scoped, tag = 'scoped memory for tpu_custom_call.1']
    #allocation14 [shape = 'u8[16384]{0}', space=vmem, size = 0x4000, scoped, tag = 'output window, operand 2']
    %14 = vsyncpa [#allocation3], 0
    %s15 = scalar_lea.sflag [#allocation3], 1
    %16 = vsyncpa %s15, 0
    %17 = vsyncpa [#allocation6], 0
    %s18 = scalar_lea.sflag [#allocation6], 1
    %19 = vsyncpa %s18, 0
    %20 = vsyncpa [#allocation9], 0
    %21 = vsyncpa [#allocation4], 0
    %s22 = scalar_lea.sflag [#allocation4], 1
    %23 = vsyncpa %s22, 0
    %24 = vsyncpa [#allocation13], 0
    %s25 = scalar_lea.sflag [#allocation13], 1
    %26 = vsyncpa %s25, 0
    loop: start=0, step=1, limit=4
    $region2: #{tpu_custom_call.1} parent=1 // loop_pre_header
      _
    $region3: #{tpu_custom_call.1} parent=1 // loop_header
      %s28 = sphi 0, %s32
      %p29 = scmp.ge.s32.totalorder %s28, 4
      %s35 = sphi 0, %s47
      %s36 = sphi 0, %s43
      %s37 = sphi 0, %s35
      %s38 = sphi 0, %s36
      %s39 = sphi 0, %s37
      %s40 = sphi 0, %s38
      %s52 = sphi 0, %s54
      %s55 = sphi 0, %s52
      %s56 = sphi 0, %s55
      %s72 = sphi 0, %s56
      %s80 = sphi 0, %s82
      %s83 = sphi 0, %s80
      %s84 = sphi 0, %s83
      %s100 = sphi 0, %s84
      %s108 = sphi 0, %s110
      %s111 = sphi 0, %s108
      %s112 = sphi 0, %s111
      %s128 = sphi 0, %s112
      %s132 = sphi 0, %s132
      %s134 = sphi 0, %s132
      %s135 = sphi 0, %s134
      %s149 = sphi 0, %s135
      %s153 = sphi 0, %s153
      %s155 = sphi 0, %s153
      %s156 = sphi 0, %s155
      %s170 = sphi 0, %s156
      %s174 = sphi 0, %s174
      %s176 = sphi 0, %s174
      %s177 = sphi 0, %s176
      %s191 = sphi 0, %s177
      %s199 = sphi 0, %s201
      %s202 = sphi 0, %s199
      %s203 = sphi 0, %s202
      %s219 = sphi 0, %s203
      %s227 = sphi 0, %s229
      %s230 = sphi 0, %s227
      %s231 = sphi 0, %s230
      %s247 = sphi 0, %s231
      %s255 = sphi 0, %s257
      %s258 = sphi 0, %s255
      %s259 = sphi 0, %s258
      %s275 = sphi 0, %s259
    $region4: #{tpu_custom_call.1} parent=1 // loop_header_branch
      %31 = sbr.rel (%p29) target = $region8
    $region5: #{tpu_custom_call.1} parent=1 // loop_body
      %s33 = ssub.s32 %s28, 1
      %s34 = ssub.s32 %s28, 2
      %s41 = sadd.s32 1, %s36
      %p42 = scmp.ge.s32.totalorder %s41, 1
      %s43 = scalar_select %p42, 0, %s41
      %s44 = sadd.s32 1, %s35
      %s45 = scalar_select %p42, %s44, %s35
      %p46 = scmp.ge.s32.totalorder %s45, 2
      %s47 = scalar_select %p46, 0, %s45
      %s48 = ssub.s32 %s35, %s47
      %s49 = ssub.s32 %s36, %s43
      %s50 = sor.u32 %s48, %s49
      %p51 = scmp.eq.s32.totalorder %s50, 0
      %s53 = sadd.s32 %s52, 1
      %s54 = scalar_select %p51, %s52, %s53
      %p57 = pneg %p51
      %p58 = scmp.eq.s32.totalorder %s28, 1
      %p59 = por %p57, %p58
      %p60 = scmp.ne.s32.totalorder %s52, %s55
      %p61 = scmp.eq.s32.totalorder %s28, 0
      %p62 = por %p60, %p61
      %p63 = scmp.ne.s32.totalorder %s52, %s55
      %p64 = scmp.eq.s32.totalorder %s33, 1
      %p65 = por %p63, %p64
      %p66 = scmp.ne.s32.totalorder %s55, %s56
      %p67 = scmp.eq.s32.totalorder %s33, 0
      %p68 = por %p66, %p67
      %p69 = scmp.ne.s32.totalorder %s55, %s56
      %p70 = scmp.eq.s32.totalorder %s34, 1
      %p71 = por %p69, %p70
      %p73 = scmp.ne.s32.totalorder %s56, %s72
      %p74 = scmp.eq.s32.totalorder %s34, 0
      %p75 = por %p73, %p74
      %s76 = ssub.s32 %s35, %s47
      %s77 = ssub.s32 %s36, %s43
      %s78 = sor.u32 %s76, %s77
      %p79 = scmp.eq.s32.totalorder %s78, 0
      %s81 = sadd.s32 %s80, 1
      %s82 = scalar_select %p79, %s80, %s81
      %p85 = pneg %p79
      %p86 = scmp.eq.s32.totalorder %s28, 1
      %p87 = por %p85, %p86
      %p88 = scmp.ne.s32.totalorder %s80, %s83
      %p89 = scmp.eq.s32.totalorder %s28, 0
      %p90 = por %p88, %p89
      %p91 = scmp.ne.s32.totalorder %s80, %s83
      %p92 = scmp.eq.s32.totalorder %s33, 1
      %p93 = por %p91, %p92
      %p94 = scmp.ne.s32.totalorder %s83, %s84
      %p95 = scmp.eq.s32.totalorder %s33, 0
      %p96 = por %p94, %p95
      %p97 = scmp.ne.s32.totalorder %s83, %s84
      %p98 = scmp.eq.s32.totalorder %s34, 1
      %p99 = por %p97, %p98
      %p101 = scmp.ne.s32.totalorder %s84, %s100
      %p102 = scmp.eq.s32.totalorder %s34, 0
      %p103 = por %p101, %p102
      %s104 = ssub.s32 %s35, %s47
      %s105 = ssub.s32 %s36, %s43
      %s106 = sor.u32 %s104, %s105
      %p107 = scmp.eq.s32.totalorder %s106, 0
      %s109 = sadd.s32 %s108, 1
      %s110 = scalar_select %p107, %s108, %s109
      %p113 = pneg %p107
      %p114 = scmp.eq.s32.totalorder %s28, 1
      %p115 = por %p113, %p114
      %p116 = scmp.ne.s32.totalorder %s108, %s111
      %p117 = scmp.eq.s32.totalorder %s28, 0
      %p118 = por %p116, %p117
      %p119 = scmp.ne.s32.totalorder %s108, %s111
      %p120 = scmp.eq.s32.totalorder %s33, 1
      %p121 = por %p119, %p120
      %p122 = scmp.ne.s32.totalorder %s111, %s112
      %p123 = scmp.eq.s32.totalorder %s33, 0
      %p124 = por %p122, %p123
      %p125 = scmp.ne.s32.totalorder %s111, %s112
      %p126 = scmp.eq.s32.totalorder %s34, 1
      %p127 = por %p125, %p126
      %p129 = scmp.ne.s32.totalorder %s112, %s128
      %p130 = scmp.eq.s32.totalorder %s34, 0
      %p131 = por %p129, %p130
      %s133 = sadd.s32 %s132, 1
      %p136 = scmp.eq.s32.totalorder %s28, 1
      %p137 = scmp.ne.s32.totalorder %s132, %s134
      %p138 = scmp.eq.s32.totalorder %s28, 0
      %p139 = por %p137, %p138
      %p140 = scmp.ne.s32.totalorder %s132, %s134
      %p141 = scmp.eq.s32.totalorder %s33, 1
      %p142 = por %p140, %p141
      %p143 = scmp.ne.s32.totalorder %s134, %s135
      %p144 = scmp.eq.s32.totalorder %s33, 0
      %p145 = por %p143, %p144
      %p146 = scmp.ne.s32.totalorder %s134, %s135
      %p147 = scmp.eq.s32.totalorder %s34, 1
      %p148 = por %p146, %p147
      %p150 = scmp.ne.s32.totalorder %s135, %s149
      %p151 = scmp.eq.s32.totalorder %s34, 0
      %p152 = por %p150, %p151
      %s154 = sadd.s32 %s153, 1
      %p157 = scmp.eq.s32.totalorder %s28, 1
      %p158 = scmp.ne.s32.totalorder %s153, %s155
      %p159 = scmp.eq.s32.totalorder %s28, 0
      %p160 = por %p158, %p159
      %p161 = scmp.ne.s32.totalorder %s153, %s155
      %p162 = scmp.eq.s32.totalorder %s33, 1
      %p163 = por %p161, %p162
      %p164 = scmp.ne.s32.totalorder %s155, %s156
      %p165 = scmp.eq.s32.totalorder %s33, 0
      %p166 = por %p164, %p165
      %p167 = scmp.ne.s32.totalorder %s155, %s156
      %p168 = scmp.eq.s32.totalorder %s34, 1
      %p169 = por %p167, %p168
      %p171 = scmp.ne.s32.totalorder %s156, %s170
      %p172 = scmp.eq.s32.totalorder %s34, 0
      %p173 = por %p171, %p172
      %s175 = sadd.s32 %s174, 1
      %p178 = scmp.eq.s32.totalorder %s28, 1
      %p179 = scmp.ne.s32.totalorder %s174, %s176
      %p180 = scmp.eq.s32.totalorder %s28, 0
      %p181 = por %p179, %p180
      %p182 = scmp.ne.s32.totalorder %s174, %s176
      %p183 = scmp.eq.s32.totalorder %s33, 1
      %p184 = por %p182, %p183
      %p185 = scmp.ne.s32.totalorder %s176, %s177
      %p186 = scmp.eq.s32.totalorder %s33, 0
      %p187 = por %p185, %p186
      %p188 = scmp.ne.s32.totalorder %s176, %s177
      %p189 = scmp.eq.s32.totalorder %s34, 1
      %p190 = por %p188, %p189
      %p192 = scmp.ne.s32.totalorder %s177, %s191
      %p193 = scmp.eq.s32.totalorder %s34, 0
      %p194 = por %p192, %p193
      %s195 = ssub.s32 %s35, %s47
      %s196 = ssub.s32 %s36, %s43
      %s197 = sor.u32 %s195, %s196
      %p198 = scmp.eq.s32.totalorder %s197, 0
      %s200 = sadd.s32 %s199, 1
      %s201 = scalar_select %p198, %s199, %s200
      %p204 = pneg %p198
      %p205 = scmp.eq.s32.totalorder %s28, 1
      %p206 = por %p204, %p205
      %p207 = scmp.ne.s32.totalorder %s199, %s202
      %p208 = scmp.eq.s32.totalorder %s28, 0
      %p209 = por %p207, %p208
      %p210 = scmp.ne.s32.totalorder %s199, %s202
      %p211 = scmp.eq.s32.totalorder %s33, 1
      %p212 = por %p210, %p211
      %p213 = scmp.ne.s32.totalorder %s202, %s203
      %p214 = scmp.eq.s32.totalorder %s33, 0
      %p215 = por %p213, %p214
      %p216 = scmp.ne.s32.totalorder %s202, %s203
      %p217 = scmp.eq.s32.totalorder %s34, 1
      %p218 = por %p216, %p217
      %p220 = scmp.ne.s32.totalorder %s203, %s219
      %p221 = scmp.eq.s32.totalorder %s34, 0
      %p222 = por %p220, %p221
      %s223 = ssub.s32 %s35, %s47
      %s224 = ssub.s32 %s36, %s43
      %s225 = sor.u32 %s223, %s224
      %p226 = scmp.eq.s32.totalorder %s225, 0
      %s228 = sadd.s32 %s227, 1
      %s229 = scalar_select %p226, %s227, %s228
      %p232 = pneg %p226
      %p233 = scmp.eq.s32.totalorder %s28, 1
      %p234 = por %p232, %p233
      %p235 = scmp.ne.s32.totalorder %s227, %s230
      %p236 = scmp.eq.s32.totalorder %s28, 0
      %p237 = por %p235, %p236
      %p238 = scmp.ne.s32.totalorder %s227, %s230
      %p239 = scmp.eq.s32.totalorder %s33, 1
      %p240 = por %p238, %p239
      %p241 = scmp.ne.s32.totalorder %s230, %s231
      %p242 = scmp.eq.s32.totalorder %s33, 0
      %p243 = por %p241, %p242
      %p244 = scmp.ne.s32.totalorder %s230, %s231
      %p245 = scmp.eq.s32.totalorder %s34, 1
      %p246 = por %p244, %p245
      %p248 = scmp.ne.s32.totalorder %s231, %s247
      %p249 = scmp.eq.s32.totalorder %s34, 0
      %p250 = por %p248, %p249
      %s251 = ssub.s32 %s35, %s47
      %s252 = ssub.s32 %s36, %s43
      %s253 = sor.u32 %s251, %s252
      %p254 = scmp.eq.s32.totalorder %s253, 0
      %s256 = sadd.s32 %s255, 1
      %s257 = scalar_select %p254, %s255, %s256
      %p260 = pneg %p254
      %p261 = scmp.eq.s32.totalorder %s28, 1
      %p262 = por %p260, %p261
      %p263 = scmp.ne.s32.totalorder %s255, %s258
      %p264 = scmp.eq.s32.totalorder %s28, 0
      %p265 = por %p263, %p264
      %p266 = scmp.ne.s32.totalorder %s255, %s258
      %p267 = scmp.eq.s32.totalorder %s33, 1
      %p268 = por %p266, %p267
      %p269 = scmp.ne.s32.totalorder %s258, %s259
      %p270 = scmp.eq.s32.totalorder %s33, 0
      %p271 = por %p269, %p270
      %p272 = scmp.ne.s32.totalorder %s258, %s259
      %p273 = scmp.eq.s32.totalorder %s34, 1
      %p274 = por %p272, %p273
      %p276 = scmp.ne.s32.totalorder %s259, %s275
      %p277 = scmp.eq.s32.totalorder %s34, 0
      %p278 = por %p276, %p277
      %p279 = scmp.le.s32.totalorder 1, %s28
      %p280 = scmp.lt.s32.totalorder %s28, 3
      %p281 = pnand %p279, %p280
      %p282 = pneg %p281
      // Predicated region
      $region9: #{tpu_custom_call.1} parent=5 // pred_check
        _
      $region10: #{tpu_custom_call.1} parent=5 // pred_check_branch
        %284 = sbr.rel (%p281) target = $region12
      $region11: #{tpu_custom_call.1} parent=5 // pred_region
        %s285 = ssub.s32 %s28, 1
        // Predicated region
        $region13: #{tpu_custom_call.1} parent=11 // pred_check
          %p286 = pneg %p145
        $region14: #{tpu_custom_call.1} parent=11 // pred_check_branch
          %288 = sbr.rel (%p286) target = $region16
        $region15: #{tpu_custom_call.1} parent=11 // pred_region
          %s290 = ssub.s32 256, 256
          %291 = vsyncadd [#allocation9], %s290
          %s292 = sshll.u32 [#allocation8], 4
          %s293 = int_to_ptr.vmem [resolvable:$true] %s292
          %298 = dma.hbm_to_vmem [thread:$0]  %s3, 256, %s293, [#allocation9], 64, 64, 4
        $region16: #{tpu_custom_call.1} parent=11 // pred_fallthru
          _
        // Predicated region
        $region17: #{tpu_custom_call.1} parent=11 // pred_check
          %p299 = pneg %p166
        $region18: #{tpu_custom_call.1} parent=11 // pred_check_branch
          %301 = sbr.rel (%p299) target = $region20
        $region19: #{tpu_custom_call.1} parent=11 // pred_region
          %s303 = ssub.s32 256, 256
          %304 = vsyncadd [#allocation9], %s303
          %s305 = sshll.u32 [#allocation10], 4
          %s306 = int_to_ptr.vmem [resolvable:$true] %s305
          %311 = dma.hbm_to_vmem [thread:$0]  %s4, 256, %s306, [#allocation9], 64, 64, 4
        $region20: #{tpu_custom_call.1} parent=11 // pred_fallthru
          _
        // Predicated region
        $region21: #{tpu_custom_call.1} parent=11 // pred_check
          %p312 = pneg %p187
        $region22: #{tpu_custom_call.1} parent=11 // pred_check_branch
          %314 = sbr.rel (%p312) target = $region24
        $region23: #{tpu_custom_call.1} parent=11 // pred_region
          _
        $region24: #{tpu_custom_call.1} parent=11 // pred_fallthru
          _
      $region12: #{tpu_custom_call.1} parent=5 // pred_fallthru
        _
      %p315 = scmp.lt.s32.totalorder %s28, 2
      // Predicated region
      $region25: #{tpu_custom_call.1} parent=5 // pred_check
        %p316 = pneg %p315
      $region26: #{tpu_custom_call.1} parent=5 // pred_check_branch
        %318 = sbr.rel (%p316) target = $region28
      $region27: #{tpu_custom_call.1} parent=5 // pred_region
        // Predicated region
        $region29: #{tpu_custom_call.1} parent=27 // pred_check
          %p319 = pneg %p62
        $region30: #{tpu_custom_call.1} parent=27 // pred_check_branch
          %321 = sbr.rel (%p319) target = $region32
        $region31: #{tpu_custom_call.1} parent=27 // pred_region
          %s322 = sand.u32 %s52, 1
          %s323 = scalar_lea.sflag [#allocation3], %s322
          %s324 = sand.u32 %s52, 1
          %s325 = smul.addr %s324, 8
          %s326 = scalar_lea.vmem [#allocation2], %s325
          %s328 = ssub.s32 128, 128
          %329 = vsyncadd %s323, %s328
          %s330 = sadd.s32 %s36, %s35
          %s331 = smul.addr %s330, 128
          %s332 = scalar_lea.hbm %s0, %s331
          %s334 = sshll.u32 %s326, 4
          %s335 = int_to_ptr.vmem [resolvable:$true] %s334
          %337 = dma.hbm_to_vmem [thread:$0]  %s332, 128, %s335, %s323
        $region32: #{tpu_custom_call.1} parent=27 // pred_fallthru
          _
        // Predicated region
        $region33: #{tpu_custom_call.1} parent=27 // pred_check
          %p338 = pneg %p90
        $region34: #{tpu_custom_call.1} parent=27 // pred_check_branch
          %340 = sbr.rel (%p338) target = $region36
        $region35: #{tpu_custom_call.1} parent=27 // pred_region
          %s341 = sand.u32 %s28, 1
          %s342 = scalar_lea.sflag [#allocation6], %s341
          %s343 = sand.u32 %s80, 1
          %s344 = smul.addr %s343, 8
          %s345 = scalar_lea.vmem [#allocation5], %s344
          %s347 = ssub.s32 128, 128
          %348 = vsyncadd %s342, %s347
          %s349 = sadd.s32 %s36, %s35
          %s350 = smul.addr %s349, 128
          %s351 = scalar_lea.hbm %s1, %s350
          %s353 = sshll.u32 %s345, 4
          %s354 = int_to_ptr.vmem [resolvable:$true] %s353
          %356 = dma.hbm_to_vmem [thread:$0]  %s351, 128, %s354, %s342
        $region36: #{tpu_custom_call.1} parent=27 // pred_fallthru
          _
        // Predicated region
        $region37: #{tpu_custom_call.1} parent=27 // pred_check
          %p357 = pneg %p118
        $region38: #{tpu_custom_call.1} parent=27 // pred_check_branch
          %359 = sbr.rel (%p357) target = $region40
        $region39: #{tpu_custom_call.1} parent=27 // pred_region
          %s360 = sand.u32 %s28, 1
          %s361 = scalar_lea.sflag [#allocation6], %s360
          %s362 = sand.u32 %s108, 1
          %s363 = smul.addr %s362, 8
          %s364 = scalar_lea.vmem [#allocation7], %s363
          %s366 = ssub.s32 128, 128
          %367 = vsyncadd %s361, %s366
          %s368 = sadd.s32 %s36, %s35
          %s369 = smul.addr %s368, 128
          %s370 = scalar_lea.hbm %s2, %s369
          %s372 = sshll.u32 %s364, 4
          %s373 = int_to_ptr.vmem [resolvable:$true] %s372
          %375 = dma.hbm_to_vmem [thread:$0]  %s370, 128, %s373, %s361
        $region40: #{tpu_custom_call.1} parent=27 // pred_fallthru
          _
      $region28: #{tpu_custom_call.1} parent=5 // pred_fallthru
        _
      %p376 = scmp.le.s32.totalorder 1, %s28
      %p377 = scmp.lt.s32.totalorder %s28, 3
      %p378 = pnand %p376, %p377
      %p379 = pneg %p378
      // Predicated region
      $region41: #{tpu_custom_call.1} parent=5 // pred_check
        _
      $region42: #{tpu_custom_call.1} parent=5 // pred_check_branch
        %381 = sbr.rel (%p378) target = $region44
      $region43: #{tpu_custom_call.1} parent=5 // pred_region
        %s382 = ssub.s32 %s28, 1
        %s383 = sand.u32 %s55, 1
        %s384 = scalar_lea.sflag [#allocation3], %s383
        %s385 = sand.u32 %s55, 1
        %s386 = smul.addr %s385, 8
        %s387 = scalar_lea.vmem [#allocation2], %s386
        // Predicated region
        $region45: #{tpu_custom_call.1} parent=43 // pred_check
          %p388 = pneg %p68
        $region46: #{tpu_custom_call.1} parent=43 // pred_check_branch
          %390 = sbr.rel (%p388) target = $region48
        $region47: #{tpu_custom_call.1} parent=43 // pred_region
          %391 = dma.done %s384, 128
        $region48: #{tpu_custom_call.1} parent=43 // pred_fallthru
          _
        %s392 = sand.u32 %s33, 1
        %s393 = scalar_lea.sflag [#allocation6], %s392
        %s394 = sand.u32 %s83, 1
        %s395 = smul.addr %s394, 8
        %s396 = scalar_lea.vmem [#allocation5], %s395
        // Predicated region
        $region49: #{tpu_custom_call.1} parent=43 // pred_check
          %p397 = pneg %p96
        $region50: #{tpu_custom_call.1} parent=43 // pred_check_branch
          %399 = sbr.rel (%p397) target = $region52
        $region51: #{tpu_custom_call.1} parent=43 // pred_region
          %400 = dma.done %s393, 128
        $region52: #{tpu_custom_call.1} parent=43 // pred_fallthru
          _
        %s401 = sand.u32 %s33, 1
        %s402 = scalar_lea.sflag [#allocation6], %s401
        %s403 = sand.u32 %s111, 1
        %s404 = smul.addr %s403, 8
        %s405 = scalar_lea.vmem [#allocation7], %s404
        // Predicated region
        $region53: #{tpu_custom_call.1} parent=43 // pred_check
          %p406 = pneg %p124
        $region54: #{tpu_custom_call.1} parent=43 // pred_check_branch
          %408 = sbr.rel (%p406) target = $region56
        $region55: #{tpu_custom_call.1} parent=43 // pred_region
          %409 = dma.done %s402, 128
        $region56: #{tpu_custom_call.1} parent=43 // pred_fallthru
          _
        // Predicated region
        $region57: #{tpu_custom_call.1} parent=43 // pred_check
          %p410 = pneg %p145
        $region58: #{tpu_custom_call.1} parent=43 // pred_check_branch
          %412 = sbr.rel (%p410) target = $region60
        $region59: #{tpu_custom_call.1} parent=43 // pred_region
          %413 = dma.done [#allocation9], 256
        $region60: #{tpu_custom_call.1} parent=43 // pred_fallthru
          _
        // Predicated region
        $region61: #{tpu_custom_call.1} parent=43 // pred_check
          %p414 = pneg %p166
        $region62: #{tpu_custom_call.1} parent=43 // pred_check_branch
          %416 = sbr.rel (%p414) target = $region64
        $region63: #{tpu_custom_call.1} parent=43 // pred_region
          %417 = dma.done [#allocation9], 256
        $region64: #{tpu_custom_call.1} parent=43 // pred_fallthru
          _
        %s418 = sand.u32 %s55, 1
        %s419 = scalar_lea.sflag [#allocation3], %s418
        %s420 = sand.u32 %s55, 1
        %s421 = smul.addr %s420, 8
        %s422 = scalar_lea.vmem [#allocation2], %s421
        %p423 = pneg %p68
        %p424 = pneg %p65
        %s425 = sand.u32 %s33, 1
        %s426 = scalar_lea.sflag [#allocation6], %s425
        %s427 = sand.u32 %s83, 1
        %s428 = smul.addr %s427, 8
        %s429 = scalar_lea.vmem [#allocation5], %s428
        %p430 = pneg %p96
        %p431 = pneg %p93
        %s432 = sand.u32 %s33, 1
        %s433 = scalar_lea.sflag [#allocation6], %s432
        %s434 = sand.u32 %s111, 1
        %s435 = smul.addr %s434, 8
        %s436 = scalar_lea.vmem [#allocation7], %s435
        %p437 = pneg %p124
        %p438 = pneg %p121
        %p439 = pneg %p145
        %p440 = pneg %p142
        %p441 = pneg %p166
        %p442 = pneg %p163
        %p443 = pneg %p187
        %p444 = pneg %p184
        %p445 = pneg %p215
        %p446 = pneg %p212
        %s447 = sand.u32 %s202, 1
        %s448 = scalar_lea.sflag [#allocation4], %s447
        %s449 = sand.u32 %s202, 1
        %s450 = smul.addr %s449, 16
        %s451 = scalar_lea.vmem [#allocation11], %s450
        %p452 = pneg %p243
        %p453 = pneg %p240
        %s454 = sand.u32 %s33, 1
        %s455 = scalar_lea.sflag [#allocation13], %s454
        %s456 = sand.u32 %s230, 1
        %s457 = smul.addr %s456, 16
        %s458 = scalar_lea.vmem [#allocation12], %s457
        %p459 = pneg %p271
        %p460 = pneg %p268
        %s461 = sand.u32 %s33, 1
        %s462 = scalar_lea.sflag [#allocation13], %s461
        %s463 = sand.u32 %s258, 1
        %s464 = smul.addr %s463, 16
        %s465 = scalar_lea.vmem [#allocation14], %s464
        %v467 = vld [vmem:[%s387] sm:$0xff]
        %v468 = vpack.c.bf16 %v467, %v467
        %v469 = vld [vmem:[#allocation8] sm:$0xf]
        %v470 = vld [vmem:[#allocation8 + $0x4] sm:$0xf]
        %v471 = vld [vmem:[#allocation8 + $0x8] sm:$0xf]
        %v472 = vld [vmem:[#allocation8 + $0xc] sm:$0xf]
        %v477 = vunpack.c.l.b16 %v469
        %v478 = vunpack.c.l.b16 %v470
        %v479 = vunpack.c.l.b16 %v471
        %v480 = vunpack.c.l.b16 %v472
        %v481 = vpack.c.b16 %v478, %v477
        %v482 = vpack.c.b16 %v480, %v479
        %vm485 = vcmask 261120
        %v487 = vsel %vm485, %v468, 0
        %489 = vmatprep.subr.bf16.mxu0 0
        %490 = vmatpush1.bf16.msra.mxu0 %v481
        %491 = vmatprep.subr.bf16.mxu0 0
        %492 = vmatpush1.bf16.msra.mxu0 %v482
        %493 = vmatprep.subr.bf16.mxu0 0
        %494 = vmatpush1.bf16.msra.mxu0 0
        %495 = vmatprep.subr.bf16.mxu0 0
        %496 = vmatpush1.bf16.msra.mxu0 0
        %497 = vmatprep.subr.bf16.mxu0 0
        %498 = vmatpush1.bf16.msra.mxu0 0
        %499 = vmatprep.subr.bf16.mxu0 0
        %500 = vmatpush1.bf16.msra.mxu0 0
        %501 = vmatprep.subr.bf16.mxu0 0
        %502 = vmatpush1.bf16.msra.mxu0 0
        %503 = vmatprep.subr.bf16.mxu0 0
        %504 = vmatpush1.bf16.msra.mxu0 0
        %505 = vmatprep.subr.bf16.mxu0 0
        %506 = vmatpush1.bf16.msra.mxu0 0
        %507 = vmatprep.subr.bf16.mxu0 0
        %508 = vmatpush1.bf16.msra.mxu0 0
        %509 = vmatprep.subr.bf16.mxu0 0
        %510 = vmatpush1.bf16.msra.mxu0 0
        %511 = vmatprep.subr.bf16.mxu0 0
        %512 = vmatpush1.bf16.msra.mxu0 0
        %513 = vmatprep.subr.bf16.mxu0 0
        %514 = vmatpush1.bf16.msra.mxu0 0
        %515 = vmatprep.subr.bf16.mxu0 0
        %516 = vmatpush1.bf16.msra.mxu0 0
        %517 = vmatprep.subr.bf16.mxu0 0
        %518 = vmatpush1.bf16.msra.mxu0 0
        %519 = vmatprep.subr.bf16.mxu0 0
        %520 = vmatpush1.bf16.msra.mxu0 0
        %521 = vmatprep.mubr.bf16.mxu0 0
        %522 = vmatmul.mubr.bf16.gmra.mrb[0].mxu0 %v487
        %v523 = vpop.f32.mrb[0].mxu0
        %v524 = vadd.f32 0.0, %v523
        %v525 = vpop.f32.mrb[0].mxu0
        %v526 = vpop.f32.mrb[0].mxu0
        %v527 = vpop.f32.mrb[0].mxu0
        %528 = vdwg.mxu0
        %v529 = vmul.f32 %v524, 0.35355338
        %v530 = vpack.c.bf16 %v529, %v529
        %vm531 = vcmask 60416
        %532 = vst.msk [vmem:[%s451] sm:$0xf] %vm531, %v530
        %v534 = vunpack.c.l.b16 %v530
        %v535 = vpack.c.b16 %v534, %v534
        %536 = vrot.lane.b32.xlu0 %v535, 120
        %v537 = vpop.permute.xlu0 %536
        %s539 = scalar_lea.vmem %s451, 4 [#allocation11]
        %540 = vst.msk [vmem:[%s539] sm:$0xf] %vm531, %v537
        %541 = vrot.lane.b32.xlu0 %v535, 112
        %v542 = vpop.permute.xlu0 %541
        %s544 = scalar_lea.vmem %s451, 8 [#allocation11]
        %545 = vst.msk [vmem:[%s544] sm:$0xf] %vm531, %v542
        %546 = vrot.lane.b32.xlu0 %v535, 104
        %v547 = vpop.permute.xlu0 %546
        %s549 = scalar_lea.vmem %s451, 12 [#allocation11]
        %550 = vst.msk [vmem:[%s549] sm:$0xf] %vm531, %v547
        %v551 = vld [vmem:[%s396] sm:$0xff]
        %v552 = vpack.c.bf16 %v551, %v551
        %v553 = vld [vmem:[#allocation10] sm:$0xf]
        %v554 = vld [vmem:[#allocation10 + $0x4] sm:$0xf]
        %v555 = vld [vmem:[#allocation10 + $0x8] sm:$0xf]
        %v556 = vld [vmem:[#allocation10 + $0xc] sm:$0xf]
        %v561 = vunpack.c.l.b16 %v553
        %v562 = vunpack.c.l.b16 %v554
        %v563 = vunpack.c.l.b16 %v555
        %v564 = vunpack.c.l.b16 %v556
        %v565 = vpack.c.b16 %v562, %v561
        %v566 = vpack.c.b16 %v564, %v563
        %v570 = vsel %vm485, %v552, 0
        %572 = vmatprep.subr.bf16.mxu0 0
        %573 = vmatpush1.bf16.msra.mxu0 %v565
        %574 = vmatprep.subr.bf16.mxu0 0
        %575 = vmatpush1.bf16.msra.mxu0 %v566
        %576 = vmatprep.subr.bf16.mxu0 0
        %577 = vmatpush1.bf16.msra.mxu0 0
        %578 = vmatprep.subr.bf16.mxu0 0
        %579 = vmatpush1.bf16.msra.mxu0 0
        %580 = vmatprep.subr.bf16.mxu0 0
        %581 = vmatpush1.bf16.msra.mxu0 0
        %582 = vmatprep.subr.bf16.mxu0 0
        %583 = vmatpush1.bf16.msra.mxu0 0
        %584 = vmatprep.subr.bf16.mxu0 0
        %585 = vmatpush1.bf16.msra.mxu0 0
        %586 = vmatprep.subr.bf16.mxu0 0
        %587 = vmatpush1.bf16.msra.mxu0 0
        %588 = vmatprep.subr.bf16.mxu0 0
        %589 = vmatpush1.bf16.msra.mxu0 0
        %590 = vmatprep.subr.bf16.mxu0 0
        %591 = vmatpush1.bf16.msra.mxu0 0
        %592 = vmatprep.subr.bf16.mxu0 0
        %593 = vmatpush1.bf16.msra.mxu0 0
        %594 = vmatprep.subr.bf16.mxu0 0
        %595 = vmatpush1.bf16.msra.mxu0 0
        %596 = vmatprep.subr.bf16.mxu0 0
        %597 = vmatpush1.bf16.msra.mxu0 0
        %598 = vmatprep.subr.bf16.mxu0 0
        %599 = vmatpush1.bf16.msra.mxu0 0
        %600 = vmatprep.subr.bf16.mxu0 0
        %601 = vmatpush1.bf16.msra.mxu0 0
        %602 = vmatprep.subr.bf16.mxu0 0
        %603 = vmatpush1.bf16.msra.mxu0 0
        %604 = vmatprep.mubr.bf16.mxu0 0
        %605 = vmatmul.mubr.bf16.gmra.mrb[0].mxu0 %v570
        %v606 = vpop.f32.mrb[0].mxu0
        %v607 = vadd.f32 0.0, %v606
        %v608 = vpop.f32.mrb[0].mxu0
        %v609 = vpop.f32.mrb[0].mxu0
        %v610 = vpop.f32.mrb[0].mxu0
        %611 = vdwg.mxu0
        %v612 = vpack.c.bf16 %v607, %v607
        %613 = vst.msk [vmem:[%s458] sm:$0xf] %vm531, %v612
        %v615 = vunpack.c.l.b16 %v612
        %v616 = vpack.c.b16 %v615, %v615
        %617 = vrot.lane.b32.xlu0 %v616, 120
        %v618 = vpop.permute.xlu0 %617
        %s620 = scalar_lea.vmem %s458, 4 [#allocation12]
        %621 = vst.msk [vmem:[%s620] sm:$0xf] %vm531, %v618
        %622 = vrot.lane.b32.xlu0 %v616, 112
        %v623 = vpop.permute.xlu0 %622
        %s625 = scalar_lea.vmem %s458, 8 [#allocation12]
        %626 = vst.msk [vmem:[%s625] sm:$0xf] %vm531, %v623
        %627 = vrot.lane.b32.xlu0 %v616, 104
        %v628 = vpop.permute.xlu0 %627
        %s630 = scalar_lea.vmem %s458, 12 [#allocation12]
        %631 = vst.msk [vmem:[%s630] sm:$0xf] %vm531, %v628
        %v632 = vld [vmem:[%s405] sm:$0xff]
        %v633 = vpack.c.bf16 %v632, %v632
        %v634 = vld [vmem:[%s5] sm:$0xf]
        %v635 = vld [vmem:[%s5 + $0x4] sm:$0xf]
        %v636 = vld [vmem:[%s5 + $0x8] sm:$0xf]
        %v637 = vld [vmem:[%s5 + $0xc] sm:$0xf]
        %v642 = vunpack.c.l.b16 %v634
        %v643 = vunpack.c.l.b16 %v635
        %v644 = vunpack.c.l.b16 %v636
        %v645 = vunpack.c.l.b16 %v637
        %v646 = vpack.c.b16 %v643, %v642
        %v647 = vpack.c.b16 %v645, %v644
        %v651 = vsel %vm485, %v633, 0
        %653 = vmatprep.subr.bf16.mxu0 0
        %654 = vmatpush1.bf16.msra.mxu0 %v646
        %655 = vmatprep.subr.bf16.mxu0 0
        %656 = vmatpush1.bf16.msra.mxu0 %v647
        %657 = vmatprep.subr.bf16.mxu0 0
        %658 = vmatpush1.bf16.msra.mxu0 0
        %659 = vmatprep.subr.bf16.mxu0 0
        %660 = vmatpush1.bf16.msra.mxu0 0
        %661 = vmatprep.subr.bf16.mxu0 0
        %662 = vmatpush1.bf16.msra.mxu0 0
        %663 = vmatprep.subr.bf16.mxu0 0
        %664 = vmatpush1.bf16.msra.mxu0 0
        %665 = vmatprep.subr.bf16.mxu0 0
        %666 = vmatpush1.bf16.msra.mxu0 0
        %667 = vmatprep.subr.bf16.mxu0 0
        %668 = vmatpush1.bf16.msra.mxu0 0
        %669 = vmatprep.subr.bf16.mxu0 0
        %670 = vmatpush1.bf16.msra.mxu0 0
        %671 = vmatprep.subr.bf16.mxu0 0
        %672 = vmatpush1.bf16.msra.mxu0 0
        %673 = vmatprep.subr.bf16.mxu0 0
        %674 = vmatpush1.bf16.msra.mxu0 0
        %675 = vmatprep.subr.bf16.mxu0 0
        %676 = vmatpush1.bf16.msra.mxu0 0
        %677 = vmatprep.subr.bf16.mxu0 0
        %678 = vmatpush1.bf16.msra.mxu0 0
        %679 = vmatprep.subr.bf16.mxu0 0
        %680 = vmatpush1.bf16.msra.mxu0 0
        %681 = vmatprep.subr.bf16.mxu0 0
        %682 = vmatpush1.bf16.msra.mxu0 0
        %683 = vmatprep.subr.bf16.mxu0 0
        %684 = vmatpush1.bf16.msra.mxu0 0
        %685 = vmatprep.mubr.bf16.mxu0 0
        %686 = vmatmul.mubr.bf16.gmra.mrb[0].mxu0 %v651
        %v687 = vpop.f32.mrb[0].mxu0
        %v688 = vadd.f32 0.0, %v687
        %v689 = vpop.f32.mrb[0].mxu0
        %v690 = vpop.f32.mrb[0].mxu0
        %v691 = vpop.f32.mrb[0].mxu0
        %692 = vdwg.mxu0
        %v693 = vpack.c.bf16 %v688, %v688
        %694 = vst.msk [vmem:[%s465] sm:$0xf] %vm531, %v693
        %v696 = vunpack.c.l.b16 %v693
        %v697 = vpack.c.b16 %v696, %v696
        %698 = vrot.lane.b32.xlu0 %v697, 120
        %v699 = vpop.permute.xlu0 %698
        %s701 = scalar_lea.vmem %s465, 4 [#allocation14]
        %702 = vst.msk [vmem:[%s701] sm:$0xf] %vm531, %v699
        %703 = vrot.lane.b32.xlu0 %v697, 112
        %v704 = vpop.permute.xlu0 %703
        %s706 = scalar_lea.vmem %s465, 8 [#allocation14]
        %707 = vst.msk [vmem:[%s706] sm:$0xf] %vm531, %v704
        %708 = vrot.lane.b32.xlu0 %v697, 104
        %v709 = vpop.permute.xlu0 %708
        %s711 = scalar_lea.vmem %s465, 12 [#allocation14]
        %712 = vst.msk [vmem:[%s711] sm:$0xf] %vm531, %v709
        %s713 = sand.u32 %s202, 1
        %s714 = scalar_lea.sflag [#allocation4], %s713
        %s715 = sand.u32 %s202, 1
        %s716 = smul.addr %s715, 16
        %s717 = scalar_lea.vmem [#allocation11], %s716
        %s718 = sand.u32 %s33, 1
        %s719 = scalar_lea.sflag [#allocation13], %s718
        %s720 = sand.u32 %s230, 1
        %s721 = smul.addr %s720, 16
        %s722 = scalar_lea.vmem [#allocation12], %s721
        %s723 = sand.u32 %s33, 1
        %s724 = scalar_lea.sflag [#allocation13], %s723
        %s725 = sand.u32 %s258, 1
        %s726 = smul.addr %s725, 16
        %s727 = scalar_lea.vmem [#allocation14], %s726
        // Predicated region
        $region65: #{tpu_custom_call.1} parent=43 // pred_check
          %p728 = pneg %p212
        $region66: #{tpu_custom_call.1} parent=43 // pred_check_branch
          %730 = sbr.rel (%p728) target = $region68
        $region67: #{tpu_custom_call.1} parent=43 // pred_region
          %s732 = ssub.s32 256, 256
          %733 = vsyncadd %s714, %s732
          %s734 = smul.addr %s37, 4
          %s735 = sadd.s32 %s38, %s734
          %s736 = smul.addr %s735, 64
          %s737 = scalar_lea.hbm %s6, %s736
          %s738 = sshll.u32 %s717, 4
          %s739 = int_to_ptr.vmem [resolvable:$true] %s738
          %744 = dma.vmem_to_hbm [thread:$0]  %s739, 256, %s737, %s714, 64, 64, 4
        $region68: #{tpu_custom_call.1} parent=43 // pred_fallthru
          _
        // Predicated region
        $region69: #{tpu_custom_call.1} parent=43 // pred_check
          %p745 = pneg %p240
        $region70: #{tpu_custom_call.1} parent=43 // pred_check_branch
          %747 = sbr.rel (%p745) target = $region72
        $region71: #{tpu_custom_call.1} parent=43 // pred_region
          %s749 = ssub.s32 256, 256
          %750 = vsyncadd %s719, %s749
          %s751 = smul.addr %s37, 4
          %s752 = sadd.s32 %s38, %s751
          %s753 = smul.addr %s752, 64
          %s754 = scalar_lea.hbm %s7, %s753
          %s755 = sshll.u32 %s722, 4
          %s756 = int_to_ptr.vmem [resolvable:$true] %s755
          %761 = dma.vmem_to_hbm [thread:$0]  %s756, 256, %s754, %s719, 64, 64, 4
        $region72: #{tpu_custom_call.1} parent=43 // pred_fallthru
          _
        // Predicated region
        $region73: #{tpu_custom_call.1} parent=43 // pred_check
          %p762 = pneg %p268
        $region74: #{tpu_custom_call.1} parent=43 // pred_check_branch
          %764 = sbr.rel (%p762) target = $region76
        $region75: #{tpu_custom_call.1} parent=43 // pred_region
          %s766 = ssub.s32 256, 256
          %767 = vsyncadd %s724, %s766
          %s768 = smul.addr %s37, 4
          %s769 = sadd.s32 %s38, %s768
          %s770 = smul.addr %s769, 64
          %s771 = scalar_lea.hbm %s8, %s770
          %s772 = sshll.u32 %s727, 4
          %s773 = int_to_ptr.vmem [resolvable:$true] %s772
          %778 = dma.vmem_to_hbm [thread:$0]  %s773, 256, %s771, %s724, 64, 64, 4
        $region76: #{tpu_custom_call.1} parent=43 // pred_fallthru
          _
      $region44: #{tpu_custom_call.1} parent=5 // pred_fallthru
        _
      %p779 = scmp.le.s32.totalorder 2, %s28
      // Predicated region
      $region77: #{tpu_custom_call.1} parent=5 // pred_check
        %p780 = pneg %p779
      $region78: #{tpu_custom_call.1} parent=5 // pred_check_branch
        %782 = sbr.rel (%p780) target = $region80
      $region79: #{tpu_custom_call.1} parent=5 // pred_region
        %s783 = ssub.s32 %s28, 2
        // Predicated region
        $region81: #{tpu_custom_call.1} parent=79 // pred_check
          %p784 = pneg %p218
        $region82: #{tpu_custom_call.1} parent=79 // pred_check_branch
          %786 = sbr.rel (%p784) target = $region84
        $region83: #{tpu_custom_call.1} parent=79 // pred_region
          %s787 = sand.u32 %s203, 1
          %s788 = scalar_lea.sflag [#allocation4], %s787
          %s789 = sand.u32 %s203, 1
          %s790 = smul.addr %s789, 16
          %s791 = scalar_lea.vmem [#allocation11], %s790
          %792 = dma.done %s788, 256
        $region84: #{tpu_custom_call.1} parent=79 // pred_fallthru
          _
        // Predicated region
        $region85: #{tpu_custom_call.1} parent=79 // pred_check
          %p793 = pneg %p246
        $region86: #{tpu_custom_call.1} parent=79 // pred_check_branch
          %795 = sbr.rel (%p793) target = $region88
        $region87: #{tpu_custom_call.1} parent=79 // pred_region
          %s796 = sand.u32 %s34, 1
          %s797 = scalar_lea.sflag [#allocation13], %s796
          %s798 = sand.u32 %s231, 1
          %s799 = smul.addr %s798, 16
          %s800 = scalar_lea.vmem [#allocation12], %s799
          %801 = dma.done %s797, 256
        $region88: #{tpu_custom_call.1} parent=79 // pred_fallthru
          _
        // Predicated region
        $region89: #{tpu_custom_call.1} parent=79 // pred_check
          %p802 = pneg %p274
        $region90: #{tpu_custom_call.1} parent=79 // pred_check_branch
          %804 = sbr.rel (%p802) target = $region92
        $region91: #{tpu_custom_call.1} parent=79 // pred_region
          %s805 = sand.u32 %s34, 1
          %s806 = scalar_lea.sflag [#allocation13], %s805
          %s807 = sand.u32 %s259, 1
          %s808 = smul.addr %s807, 16
          %s809 = scalar_lea.vmem [#allocation14], %s808
          %810 = dma.done %s806, 256
        $region92: #{tpu_custom_call.1} parent=79 // pred_fallthru
          _
      $region80: #{tpu_custom_call.1} parent=5 // pred_fallthru
        _
    $region6: #{tpu_custom_call.1} parent=1 // loop_footer
      %s32 = sadd.s32 1, %s28
    $region7: #{tpu_custom_call.1} parent=1 // loop_footer_branch
      %27 = sbr.rel target = $region3
    $region8: #{tpu_custom_call.1} parent=1 // loop_exit
      _
    %811 = vsyncpa [#allocation3], 1
    %s812 = scalar_lea.sflag [#allocation3], 1
    %813 = vsyncpa %s812, 1
    %814 = vsyncpa [#allocation6], 1
    %s815 = scalar_lea.sflag [#allocation6], 1
    %816 = vsyncpa %s815, 1
    %817 = vsyncpa [#allocation9], 1
    %818 = vsyncpa [#allocation4], 1
    %s819 = scalar_lea.sflag [#allocation4], 1
    %820 = vsyncpa %s819, 1
    %821 = vsyncpa [#allocation13], 1
    %s822 = scalar_lea.sflag [#allocation13], 1
    %823 = vsyncpa %s822, 1

</llo_original>
